<compile_context>
chip_gen: v6e
topology: v6e:2x2x1
jax: 0.10.0
libtpu: 0.0.40
codegen_flags: <defaults>
</compile_context>

<pallas_src>
import jax
import jax.numpy as jnp
from jax.experimental import pallas as pl
from jax.experimental.pallas import tpu as pltpu

LANE = 128      # vreg lane width
SUBLANE = 8     # f32 sublane count


def _round_up(x, m):
    return ((x + m - 1) // m) * m


def _tpu_vmem_and_cores():
    """Best-effort query of per-TensorCore VMEM capacity and TC count.

    Falls back to conservative defaults (64 MiB, 1 core) if the query or field
    names are unavailable, so this can never break compilation.
    """
    vmem_cap = 64 << 20   # v7x per-TC VMEM (most restrictive); v5e/v6e have 128 MiB
    n_cores = 1
    try:
        info = pltpu.get_tpu_info()
        cap = getattr(info, "vmem_capacity_bytes", None)
        if cap:
            vmem_cap = int(cap)
        for name in ("num_cores", "tensor_cores_per_chip", "tensorcores_per_chip",
                     "num_tensorcores", "core_count"):
            v = getattr(info, name, None)
            if isinstance(v, int) and v > 0:
                n_cores = v
                break
    except Exception:
        pass
    return vmem_cap, max(int(n_cores), 1)


def _choose_tile_b(b_rows, cap, min_tiles):
    """Largest multiple-of-8 divisor of b_rows that is <= cap and yields at least
    min_tiles grid steps.  b_rows must be a multiple of 8.  Using a divisor keeps
    B_pad == b_rows, i.e. no batch-padding copy."""
    n8 = b_rows // SUBLANE
    min_tiles = max(1, min(min_tiles, n8))
    best = SUBLANE
    for d in range(1, n8 + 1):
        if n8 % d:
            continue
        t = d * SUBLANE
        if t <= cap and (b_rows // t) >= min_tiles:
            best = max(best, t)
    return best


def actor_kernel(x_ref, w1_ref, b1_ref, w2_ref, b2_ref,
                 w3_ref, b3_ref, w4_ref, b4_ref, o_ref):
    bf16, f32 = jnp.bfloat16, jnp.float32
    # Matmuls run on the MXU in bf16 with f32 accumulation; bias add, ReLU and
    # tanh stay in f32 on the VPU/EUP.
    x = x_ref[...]
    if x.dtype != bf16:
        x = x.astype(bf16)
    h = jnp.dot(x, w1_ref[...], preferred_element_type=f32) + b1_ref[...]
    h = jnp.maximum(h, 0.0).astype(bf16)
    h = jnp.dot(h, w2_ref[...], preferred_element_type=f32) + b2_ref[...]
    h = jnp.maximum(h, 0.0).astype(bf16)
    h = jnp.dot(h, w3_ref[...], preferred_element_type=f32) + b3_ref[...]
    h = jnp.maximum(h, 0.0).astype(bf16)
    mu = jnp.dot(h, w4_ref[...], preferred_element_type=f32) + b4_ref[...]
    o_ref[...] = jnp.tanh(mu).astype(o_ref.dtype)


def actor_forward(obs, params, act_dim, *, tile_b=None, max_tile_b=1024,
                  single_buffer_weights=False):
    """obs: (B, obs_dim) f32 or bf16. params: lane-padded dict from prepare_actor_params.

    Returns (B, act_dim) f32 actions in [-1, 1].
    """
    B, obs_dim = obs.shape
    w1 = params["w1"]
    assert w1.shape[0] == obs_dim, "w1 must keep K = obs_dim (no row padding)"
    h_p = w1.shape[1]
    act_p = params["w4"].shape[1]

    vmem_cap, n_cores = _tpu_vmem_and_cores()

    # --- batch tiling, avoiding a wrapper-side pad copy where possible -----
    x = obs
    if tile_b is not None:
        tile_b = max(SUBLANE, _round_up(int(tile_b), SUBLANE))
        B_pad = _round_up(B, tile_b)
    elif B % SUBLANE == 0:
        B_pad = B
        tile_b = _choose_tile_b(B_pad, max_tile_b, n_cores)
    elif B <= max_tile_b:
        # Ragged small batch: one full-extent block (block dims == array dims),
        # zero padding, zero extra copies.
        B_pad, tile_b = B, B
    else:
        # Large ragged batch: pad rows to a sublane multiple (small copy), then tile.
        B_pad = _round_up(B, SUBLANE)
        tile_b = _choose_tile_b(B_pad, max_tile_b, n_cores)
    if B_pad != B:
        x = jnp.pad(obs, ((0, B_pad - B), (0, 0)))

    grid = (B_pad // tile_b,)

    weight_args = (params["w1"], params["b1"], params["w2"], params["b2"],
                   params["w3"], params["b3"], params["w4"], params["b4"])

    def row_spec(cols):
        # Batch-tiled rows; last dim covers the full array (lane-dense for the
        # padded output, full-extent for the un-padded obs columns).
        return pl.BlockSpec((tile_b, cols), lambda i: (i, 0))

    def resident_spec(shape):
        # Constant block index -> block stays VMEM-resident across grid steps
        # (no per-tile re-DMA of weights/biases).
        if single_buffer_weights:
            # Weights never cycle, so one buffer is enough; only worth it for
            # very large hidden dims under v7x's 64 MiB VMEM.
            return pl.BlockSpec(shape, lambda i: (0, 0), pipeline_mode=pl.Buffered(1))
        return pl.BlockSpec(shape, lambda i: (0, 0))

    # --- advisory cost estimate -------------------------------------------
    weight_bytes = sum(int(a.size) * a.dtype.itemsize for a in weight_args)
    flops = 2 * B_pad * (obs_dim * h_p + 2 * h_p * h_p + h_p * act_p)
    bytes_accessed = (int(x.size) * x.dtype.itemsize
                      + weight_bytes
                      + B_pad * act_p * 4)
    cost = pl.CostEstimate(flops=flops,
                           transcendentals=B_pad * act_p,   # tanh
                           bytes_accessed=bytes_accessed)

    # --- VMEM budget: per-generation, with headroom ------------------------
    per_step_io = tile_b * (obs_dim * x.dtype.itemsize + act_p * 4)
    w_bufs = 1 if single_buffer_weights else 2
    vmem_needed = 2 * per_step_io + w_bufs * weight_bytes
    vmem_limit = int(min(max(2 * vmem_needed, 16 << 20), int(0.85 * vmem_cap)))

    out = pl.pallas_call(
        actor_kernel,
        out_shape=jax.ShapeDtypeStruct((B_pad, act_p), jnp.float32),
        grid=grid,
        in_specs=[
            row_spec(obs_dim),                                      # obs tile
            resident_spec(params["w1"].shape), resident_spec(params["b1"].shape),
            resident_spec(params["w2"].shape), resident_spec(params["b2"].shape),
            resident_spec(params["w3"].shape), resident_spec(params["b3"].shape),
            resident_spec(params["w4"].shape), resident_spec(params["b4"].shape),
        ],
        out_specs=row_spec(act_p),
        compiler_params=pltpu.CompilerParams(
            dimension_semantics=("parallel",),
            vmem_limit_bytes=vmem_limit),
        cost_estimate=cost,
    )(x, *weight_args)

    return out[:B, :act_dim]


def xavier_uniform(key, fan_in, fan_out, dtype=jnp.float32):
    # Matches nn.init.xavier_uniform_ bound; stored as (in, out).
    bound = (6.0 / (fan_in + fan_out)) ** 0.5
    return jax.random.uniform(key, (fan_in, fan_out), dtype=dtype,
                              minval=-bound, maxval=bound)


def init_actor_params(key, obs_dim, action_dim, hidden2):
    """Logical (unpadded, f32) parameters matching the torch module init."""
    k1, k2, k3, k4 = jax.random.split(key, 4)
    return {
        "w1": xavier_uniform(k1, obs_dim, hidden2),
        "b1": jnp.full((1, hidden2), 0.01, jnp.float32),
        "w2": xavier_uniform(k2, hidden2, hidden2),
        "b2": jnp.full((1, hidden2), 0.01, jnp.float32),
        "w3": xavier_uniform(k3, hidden2, hidden2),
        "b3": jnp.full((1, hidden2), 0.01, jnp.float32),
        "w4": xavier_uniform(k4, hidden2, action_dim),
        "b4": jnp.full((1, action_dim), 0.01, jnp.float32),
    }


def prepare_actor_params(params):
    """Zero-pad hidden / action dims up to 128-lane multiples and cast weights to bf16.

    w1 keeps K = obs_dim (no row padding) so the obs input needs no column padding.
    Zero padding keeps the math identical (padded output columns are tanh(0.01) of
    zero-weight rows only for the hidden pad, which feed zero weights downstream;
    padded action columns are sliced off).  Do this once, outside the per-step forward.
    """
    hidden = params["w1"].shape[1]
    act_dim = params["w4"].shape[1]
    h_p = _round_up(hidden, LANE)
    act_p = _round_up(act_dim, LANE)

    def pad_cols(a, cols):
        return jnp.pad(a, ((0, 0), (0, cols - a.shape[1])))

    def pad2(a, rows, cols):
        return jnp.pad(a, ((0, rows - a.shape[0]), (0, cols - a.shape[1])))

    prepped = {
        "w1": pad_cols(params["w1"], h_p).astype(jnp.bfloat16),   # K stays obs_dim
        "b1": pad_cols(params["b1"], h_p).astype(jnp.float32),
        "w2": pad2(params["w2"], h_p, h_p).astype(jnp.bfloat16),
        "b2": pad_cols(params["b2"], h_p).astype(jnp.float32),
        "w3": pad2(params["w3"], h_p, h_p).astype(jnp.bfloat16),
        "b3": pad_cols(params["b3"], h_p).astype(jnp.float32),
        "w4": pad2(params["w4"], h_p, act_p).astype(jnp.bfloat16),
        "b4": pad_cols(params["b4"], act_p).astype(jnp.float32),
    }
    return prepped, act_dim


def actor_forward_ref_mixed(obs, p):
    """Pure-JAX reference mirroring the kernel's mixed precision (bf16 matmuls,
    f32 accumulation, f32 elementwise) on the unpadded parameters."""
    bf16, f32 = jnp.bfloat16, jnp.float32
    x = obs.astype(bf16)
    h = jnp.maximum(jnp.dot(x, p["w1"].astype(bf16), preferred_element_type=f32) + p["b1"], 0.0).astype(bf16)
    h = jnp.maximum(jnp.dot(h, p["w2"].astype(bf16), preferred_element_type=f32) + p["b2"], 0.0).astype(bf16)
    h = jnp.maximum(jnp.dot(h, p["w3"].astype(bf16), preferred_element_type=f32) + p["b3"], 0.0).astype(bf16)
    mu = jnp.dot(h, p["w4"].astype(bf16), preferred_element_type=f32) + p["b4"]
    return jnp.tanh(mu)


def actor_forward_ref_f32(obs, p):
    """Full-f32 reference (matches the PyTorch module numerically)."""
    h = jnp.maximum(obs @ p["w1"] + p["b1"], 0.0)
    h = jnp.maximum(h @ p["w2"] + p["b2"], 0.0)
    h = jnp.maximum(h @ p["w3"] + p["b3"], 0.0)
    return jnp.tanh(h @ p["w4"] + p["b4"])


if __name__ == "__main__":
    # Small shapes consistent with the module's forward (batch of flat observations).
    B, OBS_DIM, HIDDEN2, ACTION_DIM = 8, 16, 32, 8

    key = jax.random.PRNGKey(0)
    k_obs, k_params = jax.random.split(key)
    obs = jax.random.normal(k_obs, (B, OBS_DIM), dtype=jnp.float32)

    params = init_actor_params(k_params, OBS_DIM, ACTION_DIM, HIDDEN2)
    prepped, act_dim = prepare_actor_params(params)

    out = actor_forward(obs, prepped, act_dim)
    out = jax.block_until_ready(out)

    ref_mixed = actor_forward_ref_mixed(obs, params)
    ref_f32 = actor_forward_ref_f32(obs, params)
    assert out.shape == (B, ACTION_DIM)
    # Tight check against the precision-matched reference; loose sanity check
    # against the f32 (PyTorch-equivalent) reference to bound bf16 drift.
    assert jnp.allclose(out, ref_mixed, atol=2e-3, rtol=2e-3)
    assert jnp.allclose(out, ref_f32, atol=3e-2, rtol=3e-2)

    print("KERNEL_OK")
</pallas_src>

<mosaic_0001>
module attributes {stable_mosaic.version = 11 : i64} {
  func.func @actor_kernel(%arg0: i32, %arg1: memref<8x16xf32, #tpu.memory_space<vmem>>, %arg2: memref<16x128xbf16, #tpu.memory_space<vmem>>, %arg3: memref<1x128xf32, #tpu.memory_space<vmem>>, %arg4: memref<128x128xbf16, #tpu.memory_space<vmem>>, %arg5: memref<1x128xf32, #tpu.memory_space<vmem>>, %arg6: memref<128x128xbf16, #tpu.memory_space<vmem>>, %arg7: memref<1x128xf32, #tpu.memory_space<vmem>>, %arg8: memref<128x128xbf16, #tpu.memory_space<vmem>>, %arg9: memref<1x128xf32, #tpu.memory_space<vmem>>, %arg10: memref<8x128xf32, #tpu.memory_space<vmem>>) attributes {dimension_semantics = [#tpu.dimension_semantics<parallel>], iteration_bounds = array<i64: 1>, scalar_prefetch = 0 : i64, scratch_operands = 0 : i64, tpu.core_type = #tpu.core_type<tc>, window_params = [{transform_indices = @transform_0, window_bounds = array<i64: 8, 16>}, {pipeline_mode = #tpu.pipeline_mode<synchronous>, transform_indices = @transform_1, window_bounds = array<i64: 16, 128>}, {pipeline_mode = #tpu.pipeline_mode<synchronous>, transform_indices = @transform_2, window_bounds = array<i64: 1, 128>}, {pipeline_mode = #tpu.pipeline_mode<synchronous>, transform_indices = @transform_3, window_bounds = array<i64: 128, 128>}, {pipeline_mode = #tpu.pipeline_mode<synchronous>, transform_indices = @transform_4, window_bounds = array<i64: 1, 128>}, {pipeline_mode = #tpu.pipeline_mode<synchronous>, transform_indices = @transform_5, window_bounds = array<i64: 128, 128>}, {pipeline_mode = #tpu.pipeline_mode<synchronous>, transform_indices = @transform_6, window_bounds = array<i64: 1, 128>}, {pipeline_mode = #tpu.pipeline_mode<synchronous>, transform_indices = @transform_7, window_bounds = array<i64: 128, 128>}, {pipeline_mode = #tpu.pipeline_mode<synchronous>, transform_indices = @transform_8, window_bounds = array<i64: 1, 128>}, {transform_indices = @transform_9, window_bounds = array<i64: 8, 128>}]} {
    %c0 = arith.constant 0 : index
    %c0_0 = arith.constant 0 : index
    %0 = vector.load %arg1[%c0, %c0_0] : memref<8x16xf32, #tpu.memory_space<vmem>>, vector<8x16xf32>
    %1 = arith.truncf %0 : vector<8x16xf32> to vector<8x16xbf16>
    %c0_1 = arith.constant 0 : index
    %c0_2 = arith.constant 0 : index
    %2 = vector.load %arg2[%c0_1, %c0_2] : memref<16x128xbf16, #tpu.memory_space<vmem>>, vector<16x128xbf16>
    %cst = arith.constant dense<0.000000e+00> : vector<8x128xf32>
    %3 = tpu.matmul %1, %2, %cst {dimension_numbers = #tpu.dot_dimension_numbers<[1], [0], [0], [1], [0, 0, 1, 1], [], []>} : vector<8x16xbf16>, vector<16x128xbf16>, vector<8x128xf32> -> vector<8x128xf32>
    %c0_3 = arith.constant 0 : index
    %c0_4 = arith.constant 0 : index
    %4 = vector.load %arg3[%c0_3, %c0_4] : memref<1x128xf32, #tpu.memory_space<vmem>>, vector<1x128xf32>
    %5 = vector.broadcast %4 : vector<1x128xf32> to vector<8x128xf32>
    %6 = arith.addf %3, %5 : vector<8x128xf32>
    %cst_5 = arith.constant 0.000000e+00 : f32
    %7 = vector.broadcast %cst_5 : f32 to vector<8x128xf32>
    %8 = arith.maximumf %6, %7 : vector<8x128xf32>
    %9 = arith.truncf %8 : vector<8x128xf32> to vector<8x128xbf16>
    %c0_6 = arith.constant 0 : index
    %c0_7 = arith.constant 0 : index
    %10 = vector.load %arg4[%c0_6, %c0_7] : memref<128x128xbf16, #tpu.memory_space<vmem>>, vector<128x128xbf16>
    %cst_8 = arith.constant dense<0.000000e+00> : vector<8x128xf32>
    %11 = tpu.matmul %9, %10, %cst_8 {dimension_numbers = #tpu.dot_dimension_numbers<[1], [0], [0], [1], [0, 0, 1, 1], [], []>} : vector<8x128xbf16>, vector<128x128xbf16>, vector<8x128xf32> -> vector<8x128xf32>
    %c0_9 = arith.constant 0 : index
    %c0_10 = arith.constant 0 : index
    %12 = vector.load %arg5[%c0_9, %c0_10] : memref<1x128xf32, #tpu.memory_space<vmem>>, vector<1x128xf32>
    %13 = vector.broadcast %12 : vector<1x128xf32> to vector<8x128xf32>
    %14 = arith.addf %11, %13 : vector<8x128xf32>
    %cst_11 = arith.constant 0.000000e+00 : f32
    %15 = vector.broadcast %cst_11 : f32 to vector<8x128xf32>
    %16 = arith.maximumf %14, %15 : vector<8x128xf32>
    %17 = arith.truncf %16 : vector<8x128xf32> to vector<8x128xbf16>
    %c0_12 = arith.constant 0 : index
    %c0_13 = arith.constant 0 : index
    %18 = vector.load %arg6[%c0_12, %c0_13] : memref<128x128xbf16, #tpu.memory_space<vmem>>, vector<128x128xbf16>
    %cst_14 = arith.constant dense<0.000000e+00> : vector<8x128xf32>
    %19 = tpu.matmul %17, %18, %cst_14 {dimension_numbers = #tpu.dot_dimension_numbers<[1], [0], [0], [1], [0, 0, 1, 1], [], []>} : vector<8x128xbf16>, vector<128x128xbf16>, vector<8x128xf32> -> vector<8x128xf32>
    %c0_15 = arith.constant 0 : index
    %c0_16 = arith.constant 0 : index
    %20 = vector.load %arg7[%c0_15, %c0_16] : memref<1x128xf32, #tpu.memory_space<vmem>>, vector<1x128xf32>
    %21 = vector.broadcast %20 : vector<1x128xf32> to vector<8x128xf32>
    %22 = arith.addf %19, %21 : vector<8x128xf32>
    %cst_17 = arith.constant 0.000000e+00 : f32
    %23 = vector.broadcast %cst_17 : f32 to vector<8x128xf32>
    %24 = arith.maximumf %22, %23 : vector<8x128xf32>
    %25 = arith.truncf %24 : vector<8x128xf32> to vector<8x128xbf16>
    %c0_18 = arith.constant 0 : index
    %c0_19 = arith.constant 0 : index
    %26 = vector.load %arg8[%c0_18, %c0_19] : memref<128x128xbf16, #tpu.memory_space<vmem>>, vector<128x128xbf16>
    %cst_20 = arith.constant dense<0.000000e+00> : vector<8x128xf32>
    %27 = tpu.matmul %25, %26, %cst_20 {dimension_numbers = #tpu.dot_dimension_numbers<[1], [0], [0], [1], [0, 0, 1, 1], [], []>} : vector<8x128xbf16>, vector<128x128xbf16>, vector<8x128xf32> -> vector<8x128xf32>
    %c0_21 = arith.constant 0 : index
    %c0_22 = arith.constant 0 : index
    %28 = vector.load %arg9[%c0_21, %c0_22] : memref<1x128xf32, #tpu.memory_space<vmem>>, vector<1x128xf32>
    %29 = vector.broadcast %28 : vector<1x128xf32> to vector<8x128xf32>
    %30 = arith.addf %27, %29 : vector<8x128xf32>
    %31 = math.tanh %30 : vector<8x128xf32>
    %c0_23 = arith.constant 0 : index
    %c0_24 = arith.constant 0 : index
    %32 = vector.load %arg10[%c0_23, %c0_24] : memref<8x128xf32, #tpu.memory_space<vmem>>, vector<8x128xf32>
    tpu.vector_store %arg10[%c0_23, %c0_24], %31 {strides = array<i32>} : memref<8x128xf32, #tpu.memory_space<vmem>>, vector<8x128xf32>,
    return
  }
  func.func @transform_0(%arg0: i32) -> (i32, i32) {
    %c0_i32 = arith.constant 0 : i32
    %c0_i32_0 = arith.constant 0 : i32
    return %arg0, %c0_i32 : i32, i32
  }
  func.func @transform_1(%arg0: i32) -> (i32, i32) {
    %c0_i32 = arith.constant 0 : i32
    %c0_i32_0 = arith.constant 0 : i32
    %c0_i32_1 = arith.constant 0 : i32
    return %c0_i32, %c0_i32_0 : i32, i32
  }
  func.func @transform_2(%arg0: i32) -> (i32, i32) {
    %c0_i32 = arith.constant 0 : i32
    %c0_i32_0 = arith.constant 0 : i32
    %c0_i32_1 = arith.constant 0 : i32
    return %c0_i32, %c0_i32_0 : i32, i32
  }
  func.func @transform_3(%arg0: i32) -> (i32, i32) {
    %c0_i32 = arith.constant 0 : i32
    %c0_i32_0 = arith.constant 0 : i32
    %c0_i32_1 = arith.constant 0 : i32
    return %c0_i32, %c0_i32_0 : i32, i32
  }
  func.func @transform_4(%arg0: i32) -> (i32, i32) {
    %c0_i32 = arith.constant 0 : i32
    %c0_i32_0 = arith.constant 0 : i32
    %c0_i32_1 = arith.constant 0 : i32
    return %c0_i32, %c0_i32_0 : i32, i32
  }
  func.func @transform_5(%arg0: i32) -> (i32, i32) {
    %c0_i32 = arith.constant 0 : i32
    %c0_i32_0 = arith.constant 0 : i32
    %c0_i32_1 = arith.constant 0 : i32
    return %c0_i32, %c0_i32_0 : i32, i32
  }
  func.func @transform_6(%arg0: i32) -> (i32, i32) {
    %c0_i32 = arith.constant 0 : i32
    %c0_i32_0 = arith.constant 0 : i32
    %c0_i32_1 = arith.constant 0 : i32
    return %c0_i32, %c0_i32_0 : i32, i32
  }
  func.func @transform_7(%arg0: i32) -> (i32, i32) {
    %c0_i32 = arith.constant 0 : i32
    %c0_i32_0 = arith.constant 0 : i32
    %c0_i32_1 = arith.constant 0 : i32
    return %c0_i32, %c0_i32_0 : i32, i32
  }
  func.func @transform_8(%arg0: i32) -> (i32, i32) {
    %c0_i32 = arith.constant 0 : i32
    %c0_i32_0 = arith.constant 0 : i32
    %c0_i32_1 = arith.constant 0 : i32
    return %c0_i32, %c0_i32_0 : i32, i32
  }
  func.func @transform_9(%arg0: i32) -> (i32, i32) {
    %c0_i32 = arith.constant 0 : i32
    %c0_i32_0 = arith.constant 0 : i32
    return %arg0, %c0_i32 : i32, i32
  }
}

</mosaic_0001>

<llo_original>
// kernel: tpu_custom_call.1
$region0: #{tpu_custom_call.1}
  #allocation0 [shape = 'u32[]', space=smem, size = 0x4, offset = 0x4, fixed_abs, tag = 'smem constant byte address 0x4 - core index']
  #allocation1 [shape = 'u32[144,128]{1,0:T(1,128)}', space=vmem, size = 0x12000, scoped, tag = 'internal scratch']
  %s0 = inlined_call_operand.hbm [shape: f32[8,16], index: 0, kind: input, shape index: {}]
  %s1 = inlined_call_operand.hbm [shape: bf16[16,128], index: 1, kind: input, shape index: {}]
  %s2 = inlined_call_operand.vmem [shape: f32[1,128], index: 2, kind: input, shape index: {}]
  %s3 = inlined_call_operand.hbm [shape: bf16[128,128], index: 3, kind: input, shape index: {}]
  %s4 = inlined_call_operand.vmem [shape: f32[1,128], index: 4, kind: input, shape index: {}]
  %s5 = inlined_call_operand.hbm [shape: bf16[128,128], index: 5, kind: input, shape index: {}]
  %s6 = inlined_call_operand.vmem [shape: f32[1,128], index: 6, kind: input, shape index: {}]
  %s7 = inlined_call_operand.hbm [shape: bf16[128,128], index: 7, kind: input, shape index: {}]
  %s8 = inlined_call_operand.vmem [shape: f32[1,128], index: 8, kind: input, shape index: {}]
  %s9 = inlined_call_operand.hbm [shape: f32[8,128], index: 9, kind: output, shape index: {}]
  %s10 = sld [smem:[#allocation0]]
  $region66: #{tpu_custom_call.1} parent=0
    _
  %s12 = ssub.s32 1, %s10
  %s13 = scalar_select 0, %s12, %s10
  $region1: #{tpu_custom_call.1} parent=0
    #allocation2 [shape = 'u8[4096]{0}', space=vmem, size = 0x1000, scoped, tag = 'input window, operand 0, single buffered']
    #allocation3 [shape = 's32[1]{0}', space=sflag, size = 0x4, scoped, tag = 'scoped memory for tpu_custom_call.1']
    #allocation4 [shape = 's32[1]{0}', space=sflag, size = 0x4, scoped, tag = 'scoped memory for tpu_custom_call.1']
    #allocation5 [shape = 'u8[4096]{0}', space=vmem, size = 0x1000, scoped, tag = 'input window, operand 1, single buffered']
    #allocation6 [shape = 's32[1]{0}', space=sflag, size = 0x4, scoped, tag = 'scoped memory for tpu_custom_call.1']
    #allocation7 [shape = 'u8[32768]{0}', space=vmem, size = 0x8000, scoped, tag = 'input window, operand 3, single buffered']
    #allocation8 [shape = 'u8[32768]{0}', space=vmem, size = 0x8000, scoped, tag = 'input window, operand 5, single buffered']
    #allocation9 [shape = 's32[1]{0}', space=sflag, size = 0x4, scoped, tag = 'scoped memory for tpu_custom_call.1']
    #allocation10 [shape = 'u8[32768]{0}', space=vmem, size = 0x8000, scoped, tag = 'input window, operand 7, single buffered']
    #allocation11 [shape = 'u8[4096]{0}', space=vmem, size = 0x1000, scoped, tag = 'output window, operand 0, single buffered']
    %14 = vsyncpa [#allocation3], 0
    %15 = vsyncpa [#allocation6], 0
    %16 = vsyncpa [#allocation9], 0
    %17 = vsyncpa [#allocation4], 0
    // Predicated region
    $region2: #{tpu_custom_call.1} parent=1 // pred_check
      _
    $region3: #{tpu_custom_call.1} parent=1 // pred_check_branch
      %19 = sbr.rel (0) target = $region5
    $region4: #{tpu_custom_call.1} parent=1 // pred_region
      %s21 = ssub.s32 128, 128
      %22 = vsyncadd [#allocation3], %s21
      %s24 = sshll.u32 [#allocation2], 4
      %s25 = int_to_ptr.vmem [resolvable:$true] %s24
      %27 = dma.hbm_to_vmem [thread:$0]  %s0, 128, %s25, [#allocation3]
    $region5: #{tpu_custom_call.1} parent=1 // pred_fallthru
      _
    // Predicated region
    $region6: #{tpu_custom_call.1} parent=1 // pred_check
      _
    $region7: #{tpu_custom_call.1} parent=1 // pred_check_branch
      %29 = sbr.rel (0) target = $region9
    $region8: #{tpu_custom_call.1} parent=1 // pred_region
      %s31 = ssub.s32 128, 128
      %32 = vsyncadd [#allocation6], %s31
      %s33 = sshll.u32 [#allocation5], 4
      %s34 = int_to_ptr.vmem [resolvable:$true] %s33
      %39 = dma.hbm_to_vmem [thread:$0]  %s1, 128, %s34, [#allocation6], 64, 64, 4
    $region9: #{tpu_custom_call.1} parent=1 // pred_fallthru
      _
    // Predicated region
    $region10: #{tpu_custom_call.1} parent=1 // pred_check
      _
    $region11: #{tpu_custom_call.1} parent=1 // pred_check_branch
      %41 = sbr.rel (0) target = $region13
    $region12: #{tpu_custom_call.1} parent=1 // pred_region
      _
    $region13: #{tpu_custom_call.1} parent=1 // pred_fallthru
      _
    // Predicated region
    $region14: #{tpu_custom_call.1} parent=1 // pred_check
      _
    $region15: #{tpu_custom_call.1} parent=1 // pred_check_branch
      %43 = sbr.rel (0) target = $region17
    $region16: #{tpu_custom_call.1} parent=1 // pred_region
      %s45 = ssub.s32 1024, 1024
      %46 = vsyncadd [#allocation6], %s45
      %s47 = sshll.u32 [#allocation7], 4
      %s48 = int_to_ptr.vmem [resolvable:$true] %s47
      %53 = dma.hbm_to_vmem [thread:$0]  %s3, 1024, %s48, [#allocation6], 64, 64, 4
    $region17: #{tpu_custom_call.1} parent=1 // pred_fallthru
      _
    // Predicated region
    $region18: #{tpu_custom_call.1} parent=1 // pred_check
      _
    $region19: #{tpu_custom_call.1} parent=1 // pred_check_branch
      %55 = sbr.rel (0) target = $region21
    $region20: #{tpu_custom_call.1} parent=1 // pred_region
      _
    $region21: #{tpu_custom_call.1} parent=1 // pred_fallthru
      _
    // Predicated region
    $region22: #{tpu_custom_call.1} parent=1 // pred_check
      _
    $region23: #{tpu_custom_call.1} parent=1 // pred_check_branch
      %57 = sbr.rel (0) target = $region25
    $region24: #{tpu_custom_call.1} parent=1 // pred_region
      %s59 = ssub.s32 1024, 1024
      %60 = vsyncadd [#allocation9], %s59
      %s61 = sshll.u32 [#allocation8], 4
      %s62 = int_to_ptr.vmem [resolvable:$true] %s61
      %67 = dma.hbm_to_vmem [thread:$0]  %s5, 1024, %s62, [#allocation9], 64, 64, 4
    $region25: #{tpu_custom_call.1} parent=1 // pred_fallthru
      _
    // Predicated region
    $region26: #{tpu_custom_call.1} parent=1 // pred_check
      _
    $region27: #{tpu_custom_call.1} parent=1 // pred_check_branch
      %69 = sbr.rel (0) target = $region29
    $region28: #{tpu_custom_call.1} parent=1 // pred_region
      _
    $region29: #{tpu_custom_call.1} parent=1 // pred_fallthru
      _
    // Predicated region
    $region30: #{tpu_custom_call.1} parent=1 // pred_check
      _
    $region31: #{tpu_custom_call.1} parent=1 // pred_check_branch
      %71 = sbr.rel (0) target = $region33
    $region32: #{tpu_custom_call.1} parent=1 // pred_region
      %s73 = ssub.s32 1024, 1024
      %74 = vsyncadd [#allocation9], %s73
      %s75 = sshll.u32 [#allocation10], 4
      %s76 = int_to_ptr.vmem [resolvable:$true] %s75
      %81 = dma.hbm_to_vmem [thread:$0]  %s7, 1024, %s76, [#allocation9], 64, 64, 4
    $region33: #{tpu_custom_call.1} parent=1 // pred_fallthru
      _
    // Predicated region
    $region34: #{tpu_custom_call.1} parent=1 // pred_check
      _
    $region35: #{tpu_custom_call.1} parent=1 // pred_check_branch
      %83 = sbr.rel (0) target = $region37
    $region36: #{tpu_custom_call.1} parent=1 // pred_region
      _
    $region37: #{tpu_custom_call.1} parent=1 // pred_fallthru
      _
    // Predicated region
    $region38: #{tpu_custom_call.1} parent=1 // pred_check
      _
    $region39: #{tpu_custom_call.1} parent=1 // pred_check_branch
      %85 = sbr.rel (0) target = $region41
    $region40: #{tpu_custom_call.1} parent=1 // pred_region
      %86 = dma.done [#allocation3], 128
    $region41: #{tpu_custom_call.1} parent=1 // pred_fallthru
      _
    // Predicated region
    $region42: #{tpu_custom_call.1} parent=1 // pred_check
      _
    $region43: #{tpu_custom_call.1} parent=1 // pred_check_branch
      %88 = sbr.rel (0) target = $region45
    $region44: #{tpu_custom_call.1} parent=1 // pred_region
      %89 = dma.done [#allocation6], 128
    $region45: #{tpu_custom_call.1} parent=1 // pred_fallthru
      _
    // Predicated region
    $region46: #{tpu_custom_call.1} parent=1 // pred_check
      _
    $region47: #{tpu_custom_call.1} parent=1 // pred_check_branch
      %91 = sbr.rel (0) target = $region49
    $region48: #{tpu_custom_call.1} parent=1 // pred_region
      %92 = dma.done [#allocation6], 1024
    $region49: #{tpu_custom_call.1} parent=1 // pred_fallthru
      _
    // Predicated region
    $region50: #{tpu_custom_call.1} parent=1 // pred_check
      _
    $region51: #{tpu_custom_call.1} parent=1 // pred_check_branch
      %94 = sbr.rel (0) target = $region53
    $region52: #{tpu_custom_call.1} parent=1 // pred_region
      %95 = dma.done [#allocation9], 1024
    $region53: #{tpu_custom_call.1} parent=1 // pred_fallthru
      _
    // Predicated region
    $region54: #{tpu_custom_call.1} parent=1 // pred_check
      _
    $region55: #{tpu_custom_call.1} parent=1 // pred_check_branch
      %97 = sbr.rel (0) target = $region57
    $region56: #{tpu_custom_call.1} parent=1 // pred_region
      %98 = dma.done [#allocation9], 1024
    $region57: #{tpu_custom_call.1} parent=1 // pred_fallthru
      _
    %v100 = vld [vmem:[#allocation2] sm:$0xff]
    %v101 = vpack.c.bf16 %v100, %v100
    %v102 = vld [vmem:[#allocation5] sm:$0xf]
    %v103 = vld [vmem:[#allocation5 + $0x4] sm:$0xf]
    %v104 = vld [vmem:[%s2] sm:$0x1]
    %v106 = vlaneseq
    %v107 = vshrl.u32 %v106, 7
    %v108 = vsub.s32 0, %v107
    %v109 = vrot.slane %v104, %v108
    %v113 = vunpack.c.l.b16 %v102
    %v114 = vunpack.c.l.b16 %v103
    %v115 = vpack.c.b16 %v114, %v113
    %vm117 = vcmask 130048
    %v119 = vsel %vm117, %v101, 0
    %121 = vmatprep.subr.bf16.mxu0 0
    %122 = vmatpush1.bf16.msra.mxu0 0
    %123 = vmatprep.subr.bf16.mxu0 0
    %124 = vmatpush1.bf16.msra.mxu0 0
    %125 = vmatprep.subr.bf16.mxu0 0
    %126 = vmatpush1.bf16.msra.mxu0 0
    %127 = vmatprep.subr.bf16.mxu0 0
    %128 = vmatpush1.bf16.msra.mxu0 0
    %129 = vmatprep.subr.bf16.mxu0 0
    %130 = vmatpush1.bf16.msra.mxu0 0
    %131 = vmatprep.subr.bf16.mxu0 0
    %132 = vmatpush1.bf16.msra.mxu0 0
    %133 = vmatprep.subr.bf16.mxu0 0
    %134 = vmatpush1.bf16.msra.mxu0 0
    %135 = vmatprep.subr.bf16.mxu0 0
    %136 = vmatpush1.bf16.msra.mxu0 %v115
    %137 = vmatprep.subr.bf16.mxu0 0
    %138 = vmatpush2.bf16.msra.mxu0 0
    %139 = vmatprep.subr.bf16.mxu0 0
    %140 = vmatpush2.bf16.msra.mxu0 0
    %141 = vmatprep.subr.bf16.mxu0 0
    %142 = vmatpush2.bf16.msra.mxu0 0
    %143 = vmatprep.subr.bf16.mxu0 0
    %144 = vmatpush2.bf16.msra.mxu0 0
    %145 = vmatprep.subr.bf16.mxu0 0
    %146 = vmatpush2.bf16.msra.mxu0 0
    %147 = vmatprep.subr.bf16.mxu0 0
    %148 = vmatpush2.bf16.msra.mxu0 0
    %149 = vmatprep.subr.bf16.mxu0 0
    %150 = vmatpush2.bf16.msra.mxu0 0
    %151 = vmatprep.subr.bf16.mxu0 0
    %152 = vmatpush2.bf16.msra.mxu0 0
    %153 = vmatprep.mubr.bf16.mxu0 0
    %154 = vmatmul.mubr.bf16.gmra.mxu0 %v119
    %v155 = vpop.f32.mrf.mxu0
    %v156 = vadd.f32 %v109, %v155
    %v157 = vpop.f32.mrf.mxu0
    %v158 = vpop.f32.mrf.mxu0
    %v159 = vpop.f32.mrf.mxu0
    %160 = vdwg.mxu0
    %v161 = vmax.f32 %v156, 0.0
    %v162 = vpack.c.bf16 %v161, %v161
    %v163 = vld [vmem:[#allocation7] sm:$0xf]
    %v164 = vld [vmem:[#allocation7 + $0x4] sm:$0xf]
    %v165 = vld [vmem:[#allocation7 + $0x8] sm:$0xf]
    %v166 = vld [vmem:[#allocation7 + $0xc] sm:$0xf]
    %v167 = vld [vmem:[#allocation7 + $0x10] sm:$0xf]
    %v168 = vld [vmem:[#allocation7 + $0x14] sm:$0xf]
    %v169 = vld [vmem:[#allocation7 + $0x18] sm:$0xf]
    %v170 = vld [vmem:[#allocation7 + $0x1c] sm:$0xf]
    %v171 = vld [vmem:[#allocation7 + $0x20] sm:$0xf]
    %v172 = vld [vmem:[#allocation7 + $0x24] sm:$0xf]
    %v173 = vld [vmem:[#allocation7 + $0x28] sm:$0xf]
    %v174 = vld [vmem:[#allocation7 + $0x2c] sm:$0xf]
    %v175 = vld [vmem:[#allocation7 + $0x30] sm:$0xf]
    %v176 = vld [vmem:[#allocation7 + $0x34] sm:$0xf]
    %v177 = vld [vmem:[#allocation7 + $0x38] sm:$0xf]
    %v178 = vld [vmem:[#allocation7 + $0x3c] sm:$0xf]
    %v179 = vld [vmem:[%s4] sm:$0x1]
    %v181 = vlaneseq
    %v182 = vshrl.u32 %v181, 7
    %v183 = vsub.s32 0, %v182
    %v184 = vrot.slane %v179, %v183
    %v202 = vunpack.c.l.b16 %v163
    %v203 = vunpack.c.l.b16 %v164
    %v204 = vunpack.c.l.b16 %v165
    %v205 = vunpack.c.l.b16 %v166
    %v206 = vunpack.c.l.b16 %v167
    %v207 = vunpack.c.l.b16 %v168
    %v208 = vunpack.c.l.b16 %v169
    %v209 = vunpack.c.l.b16 %v170
    %v210 = vunpack.c.l.b16 %v171
    %v211 = vunpack.c.l.b16 %v172
    %v212 = vunpack.c.l.b16 %v173
    %v213 = vunpack.c.l.b16 %v174
    %v214 = vunpack.c.l.b16 %v175
    %v215 = vunpack.c.l.b16 %v176
    %v216 = vunpack.c.l.b16 %v177
    %v217 = vunpack.c.l.b16 %v178
    %v218 = vpack.c.b16 %v203, %v202
    %v219 = vpack.c.b16 %v205, %v204
    %v220 = vpack.c.b16 %v207, %v206
    %v221 = vpack.c.b16 %v209, %v208
    %v222 = vpack.c.b16 %v211, %v210
    %v223 = vpack.c.b16 %v213, %v212
    %v224 = vpack.c.b16 %v215, %v214
    %v225 = vpack.c.b16 %v217, %v216
    %234 = vmatprep.subr.bf16.mxu0 0
    %235 = vmatpush1.bf16.msra.mxu0 %v225
    %236 = vmatprep.subr.bf16.mxu0 0
    %237 = vmatpush1.bf16.msra.mxu0 %v224
    %238 = vmatprep.subr.bf16.mxu0 0
    %239 = vmatpush1.bf16.msra.mxu0 %v223
    %240 = vmatprep.subr.bf16.mxu0 0
    %241 = vmatpush1.bf16.msra.mxu0 %v222
    %242 = vmatprep.subr.bf16.mxu0 0
    %243 = vmatpush1.bf16.msra.mxu0 %v221
    %244 = vmatprep.subr.bf16.mxu0 0
    %245 = vmatpush1.bf16.msra.mxu0 %v220
    %246 = vmatprep.subr.bf16.mxu0 0
    %247 = vmatpush1.bf16.msra.mxu0 %v219
    %248 = vmatprep.subr.bf16.mxu0 0
    %249 = vmatpush1.bf16.msra.mxu0 %v218
    %250 = vmatprep.subr.bf16.mxu0 0
    %251 = vmatpush2.bf16.msra.mxu0 0
    %252 = vmatprep.subr.bf16.mxu0 0
    %253 = vmatpush2.bf16.msra.mxu0 0
    %254 = vmatprep.subr.bf16.mxu0 0
    %255 = vmatpush2.bf16.msra.mxu0 0
    %256 = vmatprep.subr.bf16.mxu0 0
    %257 = vmatpush2.bf16.msra.mxu0 0
    %258 = vmatprep.subr.bf16.mxu0 0
    %259 = vmatpush2.bf16.msra.mxu0 0
    %260 = vmatprep.subr.bf16.mxu0 0
    %261 = vmatpush2.bf16.msra.mxu0 0
    %262 = vmatprep.subr.bf16.mxu0 0
    %263 = vmatpush2.bf16.msra.mxu0 0
    %264 = vmatprep.subr.bf16.mxu0 0
    %265 = vmatpush2.bf16.msra.mxu0 0
    %266 = vmatprep.mubr.bf16.mxu0 0
    %267 = vmatmul.mubr.bf16.gmra.mxu0 %v162
    %v268 = vpop.f32.mrf.mxu0
    %v269 = vadd.f32 %v184, %v268
    %v270 = vpop.f32.mrf.mxu0
    %v271 = vpop.f32.mrf.mxu0
    %v272 = vpop.f32.mrf.mxu0
    %273 = vdwg.mxu0
    %v274 = vmax.f32 %v269, 0.0
    %v275 = vpack.c.bf16 %v274, %v274
    %v276 = vld [vmem:[#allocation8] sm:$0xf]
    %v277 = vld [vmem:[#allocation8 + $0x4] sm:$0xf]
    %v278 = vld [vmem:[#allocation8 + $0x8] sm:$0xf]
    %v279 = vld [vmem:[#allocation8 + $0xc] sm:$0xf]
    %v280 = vld [vmem:[#allocation8 + $0x10] sm:$0xf]
    %v281 = vld [vmem:[#allocation8 + $0x14] sm:$0xf]
    %v282 = vld [vmem:[#allocation8 + $0x18] sm:$0xf]
    %v283 = vld [vmem:[#allocation8 + $0x1c] sm:$0xf]
    %v284 = vld [vmem:[#allocation8 + $0x20] sm:$0xf]
    %v285 = vld [vmem:[#allocation8 + $0x24] sm:$0xf]
    %v286 = vld [vmem:[#allocation8 + $0x28] sm:$0xf]
    %v287 = vld [vmem:[#allocation8 + $0x2c] sm:$0xf]
    %v288 = vld [vmem:[#allocation8 + $0x30] sm:$0xf]
    %v289 = vld [vmem:[#allocation8 + $0x34] sm:$0xf]
    %v290 = vld [vmem:[#allocation8 + $0x38] sm:$0xf]
    %v291 = vld [vmem:[#allocation8 + $0x3c] sm:$0xf]
    %v292 = vld [vmem:[%s6] sm:$0x1]
    %v294 = vlaneseq
    %v295 = vshrl.u32 %v294, 7
    %v296 = vsub.s32 0, %v295
    %v297 = vrot.slane %v292, %v296
    %v315 = vunpack.c.l.b16 %v276
    %v316 = vunpack.c.l.b16 %v277
    %v317 = vunpack.c.l.b16 %v278
    %v318 = vunpack.c.l.b16 %v279
    %v319 = vunpack.c.l.b16 %v280
    %v320 = vunpack.c.l.b16 %v281
    %v321 = vunpack.c.l.b16 %v282
    %v322 = vunpack.c.l.b16 %v283
    %v323 = vunpack.c.l.b16 %v284
    %v324 = vunpack.c.l.b16 %v285
    %v325 = vunpack.c.l.b16 %v286
    %v326 = vunpack.c.l.b16 %v287
    %v327 = vunpack.c.l.b16 %v288
    %v328 = vunpack.c.l.b16 %v289
    %v329 = vunpack.c.l.b16 %v290
    %v330 = vunpack.c.l.b16 %v291
    %v331 = vpack.c.b16 %v316, %v315
    %v332 = vpack.c.b16 %v318, %v317
    %v333 = vpack.c.b16 %v320, %v319
    %v334 = vpack.c.b16 %v322, %v321
    %v335 = vpack.c.b16 %v324, %v323
    %v336 = vpack.c.b16 %v326, %v325
    %v337 = vpack.c.b16 %v328, %v327
    %v338 = vpack.c.b16 %v330, %v329
    %347 = vmatprep.subr.bf16.mxu0 0
    %348 = vmatpush1.bf16.msra.mxu0 %v338
    %349 = vmatprep.subr.bf16.mxu0 0
    %350 = vmatpush1.bf16.msra.mxu0 %v337
    %351 = vmatprep.subr.bf16.mxu0 0
    %352 = vmatpush1.bf16.msra.mxu0 %v336
    %353 = vmatprep.subr.bf16.mxu0 0
    %354 = vmatpush1.bf16.msra.mxu0 %v335
    %355 = vmatprep.subr.bf16.mxu0 0
    %356 = vmatpush1.bf16.msra.mxu0 %v334
    %357 = vmatprep.subr.bf16.mxu0 0
    %358 = vmatpush1.bf16.msra.mxu0 %v333
    %359 = vmatprep.subr.bf16.mxu0 0
    %360 = vmatpush1.bf16.msra.mxu0 %v332
    %361 = vmatprep.subr.bf16.mxu0 0
    %362 = vmatpush1.bf16.msra.mxu0 %v331
    %363 = vmatprep.subr.bf16.mxu0 0
    %364 = vmatpush2.bf16.msra.mxu0 0
    %365 = vmatprep.subr.bf16.mxu0 0
    %366 = vmatpush2.bf16.msra.mxu0 0
    %367 = vmatprep.subr.bf16.mxu0 0
    %368 = vmatpush2.bf16.msra.mxu0 0
    %369 = vmatprep.subr.bf16.mxu0 0
    %370 = vmatpush2.bf16.msra.mxu0 0
    %371 = vmatprep.subr.bf16.mxu0 0
    %372 = vmatpush2.bf16.msra.mxu0 0
    %373 = vmatprep.subr.bf16.mxu0 0
    %374 = vmatpush2.bf16.msra.mxu0 0
    %375 = vmatprep.subr.bf16.mxu0 0
    %376 = vmatpush2.bf16.msra.mxu0 0
    %377 = vmatprep.subr.bf16.mxu0 0
    %378 = vmatpush2.bf16.msra.mxu0 0
    %379 = vmatprep.mubr.bf16.mxu0 0
    %380 = vmatmul.mubr.bf16.gmra.mxu0 %v275
    %v381 = vpop.f32.mrf.mxu0
    %v382 = vadd.f32 %v297, %v381
    %v383 = vpop.f32.mrf.mxu0
    %v384 = vpop.f32.mrf.mxu0
    %v385 = vpop.f32.mrf.mxu0
    %386 = vdwg.mxu0
    %v387 = vmax.f32 %v382, 0.0
    %v388 = vpack.c.bf16 %v387, %v387
    %v389 = vld [vmem:[#allocation10] sm:$0xf]
    %v390 = vld [vmem:[#allocation10 + $0x4] sm:$0xf]
    %v391 = vld [vmem:[#allocation10 + $0x8] sm:$0xf]
    %v392 = vld [vmem:[#allocation10 + $0xc] sm:$0xf]
    %v393 = vld [vmem:[#allocation10 + $0x10] sm:$0xf]
    %v394 = vld [vmem:[#allocation10 + $0x14] sm:$0xf]
    %v395 = vld [vmem:[#allocation10 + $0x18] sm:$0xf]
    %v396 = vld [vmem:[#allocation10 + $0x1c] sm:$0xf]
    %v397 = vld [vmem:[#allocation10 + $0x20] sm:$0xf]
    %v398 = vld [vmem:[#allocation10 + $0x24] sm:$0xf]
    %v399 = vld [vmem:[#allocation10 + $0x28] sm:$0xf]
    %v400 = vld [vmem:[#allocation10 + $0x2c] sm:$0xf]
    %v401 = vld [vmem:[#allocation10 + $0x30] sm:$0xf]
    %v402 = vld [vmem:[#allocation10 + $0x34] sm:$0xf]
    %v403 = vld [vmem:[#allocation10 + $0x38] sm:$0xf]
    %v404 = vld [vmem:[#allocation10 + $0x3c] sm:$0xf]
    %v405 = vld [vmem:[%s8] sm:$0x1]
    %v407 = vlaneseq
    %v408 = vshrl.u32 %v407, 7
    %v409 = vsub.s32 0, %v408
    %v410 = vrot.slane %v405, %v409
    %v428 = vunpack.c.l.b16 %v389
    %v429 = vunpack.c.l.b16 %v390
    %v430 = vunpack.c.l.b16 %v391
    %v431 = vunpack.c.l.b16 %v392
    %v432 = vunpack.c.l.b16 %v393
    %v433 = vunpack.c.l.b16 %v394
    %v434 = vunpack.c.l.b16 %v395
    %v435 = vunpack.c.l.b16 %v396
    %v436 = vunpack.c.l.b16 %v397
    %v437 = vunpack.c.l.b16 %v398
    %v438 = vunpack.c.l.b16 %v399
    %v439 = vunpack.c.l.b16 %v400
    %v440 = vunpack.c.l.b16 %v401
    %v441 = vunpack.c.l.b16 %v402
    %v442 = vunpack.c.l.b16 %v403
    %v443 = vunpack.c.l.b16 %v404
    %v444 = vpack.c.b16 %v429, %v428
    %v445 = vpack.c.b16 %v431, %v430
    %v446 = vpack.c.b16 %v433, %v432
    %v447 = vpack.c.b16 %v435, %v434
    %v448 = vpack.c.b16 %v437, %v436
    %v449 = vpack.c.b16 %v439, %v438
    %v450 = vpack.c.b16 %v441, %v440
    %v451 = vpack.c.b16 %v443, %v442
    %460 = vmatprep.subr.bf16.mxu0 0
    %461 = vmatpush1.bf16.msra.mxu0 %v451
    %462 = vmatprep.subr.bf16.mxu0 0
    %463 = vmatpush1.bf16.msra.mxu0 %v450
    %464 = vmatprep.subr.bf16.mxu0 0
    %465 = vmatpush1.bf16.msra.mxu0 %v449
    %466 = vmatprep.subr.bf16.mxu0 0
    %467 = vmatpush1.bf16.msra.mxu0 %v448
    %468 = vmatprep.subr.bf16.mxu0 0
    %469 = vmatpush1.bf16.msra.mxu0 %v447
    %470 = vmatprep.subr.bf16.mxu0 0
    %471 = vmatpush1.bf16.msra.mxu0 %v446
    %472 = vmatprep.subr.bf16.mxu0 0
    %473 = vmatpush1.bf16.msra.mxu0 %v445
    %474 = vmatprep.subr.bf16.mxu0 0
    %475 = vmatpush1.bf16.msra.mxu0 %v444
    %476 = vmatprep.subr.bf16.mxu0 0
    %477 = vmatpush2.bf16.msra.mxu0 0
    %478 = vmatprep.subr.bf16.mxu0 0
    %479 = vmatpush2.bf16.msra.mxu0 0
    %480 = vmatprep.subr.bf16.mxu0 0
    %481 = vmatpush2.bf16.msra.mxu0 0
    %482 = vmatprep.subr.bf16.mxu0 0
    %483 = vmatpush2.bf16.msra.mxu0 0
    %484 = vmatprep.subr.bf16.mxu0 0
    %485 = vmatpush2.bf16.msra.mxu0 0
    %486 = vmatprep.subr.bf16.mxu0 0
    %487 = vmatpush2.bf16.msra.mxu0 0
    %488 = vmatprep.subr.bf16.mxu0 0
    %489 = vmatpush2.bf16.msra.mxu0 0
    %490 = vmatprep.subr.bf16.mxu0 0
    %491 = vmatpush2.bf16.msra.mxu0 0
    %492 = vmatprep.mubr.bf16.mxu0 0
    %493 = vmatmul.mubr.bf16.gmra.mxu0 %v388
    %v494 = vpop.f32.mrf.mxu0
    %v495 = vadd.f32 %v410, %v494
    %v496 = vpop.f32.mrf.mxu0
    %v497 = vpop.f32.mrf.mxu0
    %v498 = vpop.f32.mrf.mxu0
    %499 = vdwg.mxu0
    %v500 = vtanh.pop %v495
    %501 = vst [vmem:[#allocation11] sm:$0xff] %v500
    // Predicated region
    $region58: #{tpu_custom_call.1} parent=1 // pred_check
      _
    $region59: #{tpu_custom_call.1} parent=1 // pred_check_branch
      %503 = sbr.rel (0) target = $region61
    $region60: #{tpu_custom_call.1} parent=1 // pred_region
      %s505 = ssub.s32 128, 128
      %506 = vsyncadd [#allocation4], %s505
      %s508 = sshll.u32 [#allocation11], 4
      %s509 = int_to_ptr.vmem [resolvable:$true] %s508
      %511 = dma.vmem_to_hbm [thread:$0]  %s509, 128, %s9, [#allocation4]
    $region61: #{tpu_custom_call.1} parent=1 // pred_fallthru
      _
    // Predicated region
    $region62: #{tpu_custom_call.1} parent=1 // pred_check
      _
    $region63: #{tpu_custom_call.1} parent=1 // pred_check_branch
      %513 = sbr.rel (0) target = $region65
    $region64: #{tpu_custom_call.1} parent=1 // pred_region
      %514 = dma.done [#allocation4], 128
    $region65: #{tpu_custom_call.1} parent=1 // pred_fallthru
      _
    %515 = vsyncpa [#allocation3], 1
    %516 = vsyncpa [#allocation6], 1
    %517 = vsyncpa [#allocation9], 1
    %518 = vsyncpa [#allocation4], 1

</llo_original>
